<compile_context>
chip_gen: v6e
topology: v6e:2x2x1
jax: 0.10.0
libtpu: 0.0.40
codegen_flags: <defaults>
</compile_context>

<pallas_src>
import jax
import jax.numpy as jnp
from jax.experimental import pallas as pl
from jax.experimental.pallas import tpu as pltpu


def _linear_noise_relu_kernel(x_ref, p_ref, o_ref):
    # x_ref: SMEM (F,)    float32 -- the single input row
    # p_ref: SMEM (F+2,)  float32 -- [w_0..w_{F-1}, bias, noise]
    # o_ref: VMEM (1, 1)  float32 -- relu(x @ W.T + b + noise)
    f = x_ref.shape[0]

    # F=4 contraction fully on the scalar unit (sregs): no MXU, no XLU
    # reduction, no vector loads.
    acc = x_ref[0] * p_ref[0]
    for i in range(1, f):
        acc = acc + x_ref[i] * p_ref[i]

    v2 = acc + p_ref[f] + p_ref[f + 1]          # + bias + noise
    v3 = jnp.maximum(v2, 0.0)                   # relu (scalar)

    # Single scalar -> vreg splat for the (1,1) output writeback.
    o_ref[...] = jnp.broadcast_to(v3, o_ref.shape)


def linear_noise_relu(x, weight, bias, noise):
    """x: (1, F) f32; weight: (1, F) f32; bias: (1,) f32; noise: (1, 1) f32."""
    n, f = x.shape
    assert n == 1, "scalar-path kernel is specialized to the module's (1, F) input"
    assert weight.shape == (1, f) and bias.shape == (1,) and noise.shape == (n, 1)

    # Pack weight, bias and the pre-generated U[0,1) noise into one SMEM
    # operand (fewer custom-call operands / SMEM allocations).
    params = jnp.concatenate(
        [weight.reshape(-1), bias.reshape(-1), noise.reshape(-1)]
    ).astype(jnp.float32)                        # (F + 2,)

    return pl.pallas_call(
        _linear_noise_relu_kernel,
        out_shape=jax.ShapeDtypeStruct((n, 1), jnp.float32),
        in_specs=[
            pl.BlockSpec(memory_space=pltpu.MemorySpace.SMEM),   # x      (F,)
            pl.BlockSpec(memory_space=pltpu.MemorySpace.SMEM),   # params (F+2,)
        ],
        out_specs=pl.BlockSpec((n, 1), lambda: (0, 0),
                               memory_space=pltpu.MemorySpace.VMEM),
    )(x.reshape(-1).astype(jnp.float32), params)


if __name__ == "__main__":
    key = jax.random.PRNGKey(0)
    k_x, k_w, k_b, k_n = jax.random.split(key, 4)

    # Shapes implied by the module: x1 = rand(1, 4), Linear(4, 1)
    N, F_IN, F_OUT = 1, 4, 1

    x1 = jax.random.uniform(k_x, (N, F_IN), dtype=jnp.float32)
    # nn.Linear default init: U(-1/sqrt(F_IN), 1/sqrt(F_IN))
    bound = 1.0 / jnp.sqrt(jnp.float32(F_IN))
    weight = jax.random.uniform(k_w, (F_OUT, F_IN), dtype=jnp.float32,
                                minval=-bound, maxval=bound)
    bias = jax.random.uniform(k_b, (F_OUT,), dtype=jnp.float32,
                              minval=-bound, maxval=bound)
    # torch.rand_like(v1): uniform [0,1) noise, same shape as the linear output.
    noise = jax.random.uniform(k_n, (N, F_OUT), dtype=jnp.float32)

    out = jax.block_until_ready(linear_noise_relu(x1, weight, bias, noise))

    # Exact reference (same noise tensor is fed to both paths).
    ref = jnp.maximum(x1 @ weight.T + bias + noise, 0.0)
    assert out.shape == (N, F_OUT)
    assert bool(jnp.all(jnp.isfinite(out)))
    assert bool(jnp.allclose(out, ref, atol=1e-6, rtol=1e-6)), (out, ref)

    # Determinism: same inputs (incl. same noise) -> identical output.
    out2 = jax.block_until_ready(linear_noise_relu(x1, weight, bias, noise))
    assert bool(jnp.all(out == out2))

    print("KERNEL_OK")
</pallas_src>

<mosaic_0001>
module attributes {stable_mosaic.version = 11 : i64} {
  func.func @_linear_noise_relu_kernel(%arg0: memref<4xf32, #tpu.memory_space<smem>>, %arg1: memref<6xf32, #tpu.memory_space<smem>>, %arg2: memref<1x1xf32, #tpu.memory_space<vmem>>) attributes {dimension_semantics = [], scalar_prefetch = 0 : i64, scratch_operands = 0 : i64, tpu.core_type = #tpu.core_type<tc>} {
    %c0 = arith.constant 0 : index
    %0 = memref.load %arg0[%c0] : memref<4xf32, #tpu.memory_space<smem>>
    %c0_0 = arith.constant 0 : index
    %1 = memref.load %arg1[%c0_0] : memref<6xf32, #tpu.memory_space<smem>>
    %2 = arith.mulf %0, %1 : f32
    %c1 = arith.constant 1 : index
    %3 = memref.load %arg0[%c1] : memref<4xf32, #tpu.memory_space<smem>>
    %c1_1 = arith.constant 1 : index
    %4 = memref.load %arg1[%c1_1] : memref<6xf32, #tpu.memory_space<smem>>
    %5 = arith.mulf %3, %4 : f32
    %6 = arith.addf %2, %5 : f32
    %c2 = arith.constant 2 : index
    %7 = memref.load %arg0[%c2] : memref<4xf32, #tpu.memory_space<smem>>
    %c2_2 = arith.constant 2 : index
    %8 = memref.load %arg1[%c2_2] : memref<6xf32, #tpu.memory_space<smem>>
    %9 = arith.mulf %7, %8 : f32
    %10 = arith.addf %6, %9 : f32
    %c3 = arith.constant 3 : index
    %11 = memref.load %arg0[%c3] : memref<4xf32, #tpu.memory_space<smem>>
    %c3_3 = arith.constant 3 : index
    %12 = memref.load %arg1[%c3_3] : memref<6xf32, #tpu.memory_space<smem>>
    %13 = arith.mulf %11, %12 : f32
    %14 = arith.addf %10, %13 : f32
    %c4 = arith.constant 4 : index
    %15 = memref.load %arg1[%c4] : memref<6xf32, #tpu.memory_space<smem>>
    %16 = arith.addf %14, %15 : f32
    %c5 = arith.constant 5 : index
    %17 = memref.load %arg1[%c5] : memref<6xf32, #tpu.memory_space<smem>>
    %18 = arith.addf %16, %17 : f32
    %cst = arith.constant 0.000000e+00 : f32
    %19 = arith.maximumf %18, %cst : f32
    %20 = vector.broadcast %19 : f32 to vector<1x1xf32>
    %c0_4 = arith.constant 0 : index
    %c0_5 = arith.constant 0 : index
    %21 = vector.load %arg2[%c0_4, %c0_5] : memref<1x1xf32, #tpu.memory_space<vmem>>, vector<1x1xf32>
    tpu.vector_store %arg2[%c0_4, %c0_5], %20 {strides = array<i32>} : memref<1x1xf32, #tpu.memory_space<vmem>>, vector<1x1xf32>,
    return
  }
}

</mosaic_0001>

<llo_original>
// kernel: tpu_custom_call.1
$region0: #{tpu_custom_call.1}
  #allocation0 [shape = 'u32[]', space=smem, size = 0x4, offset = 0x4, fixed_abs, tag = 'smem constant byte address 0x4 - core index']
  #allocation1 [shape = 'u32[144,128]{1,0:T(1,128)}', space=vmem, size = 0x12000, scoped, tag = 'internal scratch']
  %s0 = inlined_call_operand.hbm [shape: f32[4], index: 0, kind: input, shape index: {}]
  %s1 = inlined_call_operand.vmem [shape: f32[6], index: 1, kind: input, shape index: {}]
  %s2 = inlined_call_operand.hbm [shape: f32[1,1], index: 2, kind: output, shape index: {}]
  %s3 = sld [smem:[#allocation0]]
  $region26: #{tpu_custom_call.1} parent=0
    _
  %s5 = ssub.s32 1, %s3
  %s6 = scalar_select 0, %s5, %s3
  $region1: #{tpu_custom_call.1} parent=0
    #allocation2 [shape = 'u8[512]{0}', space=smem, size = 0x200, scoped, tag = 'input window, operand 0, single buffered']
    #allocation3 [shape = 's32[1]{0}', space=sflag, size = 0x4, scoped, tag = 'scoped memory for tpu_custom_call.1']
    #allocation4 [shape = 's32[1]{0}', space=sflag, size = 0x4, scoped, tag = 'scoped memory for tpu_custom_call.1']
    #allocation5 [shape = 's32[1]{0}', space=sflag, size = 0x4, scoped, tag = 'scoped memory for tpu_custom_call.1']
    #allocation6 [shape = 'u8[512]{0}', space=smem, size = 0x200, scoped, tag = 'input window, operand 1, single buffered']
    #allocation7 [shape = 'u8[512]{0}', space=vmem, size = 0x400, scoped, tag = 'output window, operand 0, single buffered']
    %7 = vsyncpa [#allocation4], 0
    %8 = vsyncpa [#allocation5], 0
    %9 = vsyncpa [#allocation3], 0
    // Predicated region
    $region2: #{tpu_custom_call.1} parent=1 // pred_check
      _
    $region3: #{tpu_custom_call.1} parent=1 // pred_check_branch
      %11 = sbr.rel (0) target = $region5
    $region4: #{tpu_custom_call.1} parent=1 // pred_region
      %s13 = ssub.s32 16, 16
      %14 = vsyncadd [#allocation4], %s13
      %17 = dma.hbm_to_smem %s0, 16, [#allocation2], [#allocation4]
    $region5: #{tpu_custom_call.1} parent=1 // pred_fallthru
      _
    // Predicated region
    $region6: #{tpu_custom_call.1} parent=1 // pred_check
      _
    $region7: #{tpu_custom_call.1} parent=1 // pred_check_branch
      %19 = sbr.rel (0) target = $region9
    $region8: #{tpu_custom_call.1} parent=1 // pred_region
      %s21 = ssub.s32 16, 16
      %22 = vsyncadd [#allocation5], %s21
      %s24 = sshll.u32 %s1, 4
      %s25 = int_to_ptr.vmem [resolvable:$true] %s24
      %27 = dma.vmem_to_smem %s25, 16, [#allocation6], [#allocation5]
    $region9: #{tpu_custom_call.1} parent=1 // pred_fallthru
      _
    // Predicated region
    $region10: #{tpu_custom_call.1} parent=1 // pred_check
      _
    $region11: #{tpu_custom_call.1} parent=1 // pred_check_branch
      %29 = sbr.rel (0) target = $region13
    $region12: #{tpu_custom_call.1} parent=1 // pred_region
      %30 = dma.done [#allocation4], 16
    $region13: #{tpu_custom_call.1} parent=1 // pred_fallthru
      _
    // Predicated region
    $region14: #{tpu_custom_call.1} parent=1 // pred_check
      _
    $region15: #{tpu_custom_call.1} parent=1 // pred_check_branch
      %32 = sbr.rel (0) target = $region17
    $region16: #{tpu_custom_call.1} parent=1 // pred_region
      %33 = dma.done [#allocation5], 16
    $region17: #{tpu_custom_call.1} parent=1 // pred_fallthru
      _
    %34 = sfence
    %s35 = sld [smem:[#allocation2]]
    %s36 = sld [smem:[#allocation6]]
    %s37 = smul.f32 %s35, %s36
    %s38 = sld [smem:[#allocation2 + $0x1]]
    %s39 = sld [smem:[#allocation6 + $0x1]]
    %s40 = smul.f32 %s38, %s39
    %s41 = sadd.f32 %s37, %s40
    %s42 = sld [smem:[#allocation2 + $0x2]]
    %s43 = sld [smem:[#allocation6 + $0x2]]
    %s44 = smul.f32 %s42, %s43
    %s45 = sadd.f32 %s41, %s44
    %s46 = sld [smem:[#allocation2 + $0x3]]
    %s47 = sld [smem:[#allocation6 + $0x3]]
    %s48 = smul.f32 %s46, %s47
    %s49 = sadd.f32 %s45, %s48
    %s50 = sld [smem:[#allocation6 + $0x4]]
    %s51 = sadd.f32 %s49, %s50
    %s52 = sld [smem:[#allocation6 + $0x5]]
    %s53 = sadd.f32 %s51, %s52
    %s54 = smax.f32 %s53, 0.0
    %v55 = vstv %s54
    %vm56 = vcmask 0
    %57 = vst.msk [vmem:[#allocation7] sm:$0x1] %vm56, %v55
    // Predicated region
    $region18: #{tpu_custom_call.1} parent=1 // pred_check
      _
    $region19: #{tpu_custom_call.1} parent=1 // pred_check_branch
      %59 = sbr.rel (0) target = $region21
    $region20: #{tpu_custom_call.1} parent=1 // pred_region
      %s61 = ssub.s32 16, 16
      %62 = vsyncadd [#allocation3], %s61
      %s64 = sshll.u32 [#allocation7], 4
      %s65 = int_to_ptr.vmem [resolvable:$true] %s64
      %67 = dma.vmem_to_hbm [thread:$0]  %s65, 16, %s2, [#allocation3]
    $region21: #{tpu_custom_call.1} parent=1 // pred_fallthru
      _
    // Predicated region
    $region22: #{tpu_custom_call.1} parent=1 // pred_check
      _
    $region23: #{tpu_custom_call.1} parent=1 // pred_check_branch
      %69 = sbr.rel (0) target = $region25
    $region24: #{tpu_custom_call.1} parent=1 // pred_region
      %70 = dma.done [#allocation3], 16
    $region25: #{tpu_custom_call.1} parent=1 // pred_fallthru
      _
    %71 = vsyncpa [#allocation3], 1
    %72 = vsyncpa [#allocation4], 1
    %73 = vsyncpa [#allocation5], 1

</llo_original>
